<compile_context>
chip_gen: v6e
topology: v6e:2x2x1
jax: 0.10.0
libtpu: 0.0.40
codegen_flags: <defaults>
</compile_context>

<pallas_src>
import functools

import jax
import jax.numpy as jnp
from jax import lax
from jax.experimental import pallas as pl
from jax.experimental.pallas import tpu as pltpu

LANE = 128


def _round_up(x, m):
    return (x + m - 1) // m * m


def _vmem_limit_bytes():
    """Scoped VMEM limit derived from the actual chip (v7x has only 64 MiB)."""
    cap = 64 * 1024 * 1024  # conservative default = v7x physical VMEM
    try:
        info = pltpu.get_tpu_info()
        cap = int(getattr(info, "vmem_capacity_bytes", cap) or cap)
    except Exception:
        pass
    return int(min(cap * 3 // 4, 112 * 1024 * 1024))


def _conv_stats_kernel(p_ref, w_ref, b_ref, y_ref, sum_ref, sq_ref):
    """Pass 1: y = W @ patches + b (channel-major tile), accumulate sum/sumsq."""
    t = pl.program_id(1)

    @pl.when(t == 0)
    def _():
        sum_ref[...] = jnp.zeros_like(sum_ref)
        sq_ref[...] = jnp.zeros_like(sq_ref)

    # (Cout, KD) @ (KD, thw) on the MXU; bf16 (or f32) operands, f32 accumulation.
    y = jnp.dot(w_ref[...], p_ref[0], preferred_element_type=jnp.float32)
    y = y + b_ref[...]                       # (Cout, thw) + (Cout, 1)
    y_ref[0] = y.astype(y_ref.dtype)         # lane-dense store along HW

    # BatchNorm batch statistics: reduce along the lane (HW) axis.  No padding
    # mask -- padded columns contribute exactly `bias`, corrected in wrapper.
    sum_ref[0] += jnp.sum(y, axis=1, keepdims=True)
    sq_ref[0] += jnp.sum(y * y, axis=1, keepdims=True)


def _bn_act_kernel(y_ref, a_ref, c_ref, o_ref, *, negative_slope):
    """Pass 2: z = y * a + c (folded BN + affine), then LeakyReLU, NCHW order."""
    z = y_ref[0].astype(jnp.float32) * a_ref[...] + c_ref[...]
    o_ref[0] = jnp.where(z >= 0, z, negative_slope * z)


def encoder_block_forward(x, weight, bias, gamma, beta, *, stride, padding,
                          eps=1e-5, negative_slope=0.1, use_bf16=True):
    """x: (N, Cin, H, W) f32 (NCHW, like PyTorch).  Returns (N, Cout, Ho, Wo) f32.

    use_bf16=True runs the conv matmul with bf16 operands (~1e-2 relative
    divergence from the f32 PyTorch module, half the input HBM traffic); all
    BatchNorm / activation math stays in f32.
    """
    N, Cin, H, W = x.shape
    Cout, _, Kh, Kw = weight.shape
    Ho = (H + 2 * padding - Kh) // stride + 1
    Wo = (W + 2 * padding - Kw) // stride + 1
    HW = Ho * Wo
    KD = Cin * Kh * Kw
    M = N * HW

    in_dtype = jnp.bfloat16 if use_bf16 else jnp.float32
    # Cast BEFORE patch extraction so the large patches array is born bf16.
    xq = x.astype(in_dtype)

    # Patch extraction with a single XLA op, channel-major output
    # (N, KD, Ho, Wo) with KD ordered (cin, kh, kw) -- matches weight.reshape.
    patches = lax.conv_general_dilated_patches(
        xq, (Kh, Kw), (stride, stride),
        ((padding, padding), (padding, padding)),
        dimension_numbers=('NCHW', 'OIHW', 'NCHW'))
    patches = patches.reshape(N, KD, HW)

    # ---- dtype of the conv intermediate -------------------------------------
    # bf16 only pays off if Cout fills the (16, 128) bf16 sublane tile.
    y_dtype = jnp.bfloat16 if (use_bf16 and Cout % 16 == 0) else jnp.float32
    pbytes = 2 if in_dtype == jnp.bfloat16 else 4
    ybytes = 2 if y_dtype == jnp.bfloat16 else 4

    # ---- per-generation tiling ----------------------------------------------
    vmem_limit = _vmem_limit_bytes()
    tile_budget = vmem_limit // 3          # bytes allowed for double-buffered blocks

    # pass-1 HW tile: double-buffered patches block + y block per HW column.
    per_col1 = 2 * (KD * pbytes + Cout * ybytes)
    if HW <= LANE:
        thw1, HWp = HW, HW                 # full-dim block, no padding
    else:
        max_cols = max(LANE, tile_budget // per_col1 // LANE * LANE)
        thw1 = min(max_cols, _round_up(HW, LANE), 8192)
        # keep zero-padding of the HW axis under ~12.5%
        while thw1 > LANE and (_round_up(HW, thw1) - HW) * 8 > HW:
            thw1 -= LANE
        HWp = _round_up(HW, thw1)
    T1 = HWp // thw1
    if HWp != HW:
        patches = jnp.pad(patches, ((0, 0), (0, 0), (0, HWp - HW)))

    w2 = weight.reshape(Cout, KD).astype(in_dtype)        # (Cout, KD)
    b2 = bias.reshape(Cout, 1).astype(jnp.float32)        # (Cout, 1)

    # ------------------------- pass 1: conv + batch stats --------------------
    cost1 = pl.CostEstimate(
        flops=int(2 * N * HWp * KD * Cout),
        transcendentals=0,
        bytes_accessed=int(N * HWp * (KD * pbytes + Cout * ybytes)
                           + KD * Cout * pbytes))

    y, ssum, ssq = pl.pallas_call(
        _conv_stats_kernel,
        out_shape=(jax.ShapeDtypeStruct((N, Cout, HWp), y_dtype),
                   jax.ShapeDtypeStruct((N, Cout, 1), jnp.float32),
                   jax.ShapeDtypeStruct((N, Cout, 1), jnp.float32)),
        grid=(N, T1),
        in_specs=[pl.BlockSpec((1, KD, thw1), lambda n, t: (n, 0, t)),
                  pl.BlockSpec((Cout, KD), lambda n, t: (0, 0)),
                  pl.BlockSpec((Cout, 1), lambda n, t: (0, 0))],
        out_specs=(pl.BlockSpec((1, Cout, thw1), lambda n, t: (n, 0, t)),
                   pl.BlockSpec((1, Cout, 1), lambda n, t: (n, 0, 0)),   # resident
                   pl.BlockSpec((1, Cout, 1), lambda n, t: (n, 0, 0))),  # accumulators
        compiler_params=pltpu.CompilerParams(
            dimension_semantics=("parallel", "arbitrary"),
            vmem_limit_bytes=vmem_limit),
        cost_estimate=cost1,
    )(patches, w2, b2)

    # ---- tiny per-channel prep (C-length vectors, plain JAX) ----------------
    ssum = ssum.reshape(N, Cout).sum(axis=0)
    ssq = ssq.reshape(N, Cout).sum(axis=0)
    # Padded HW columns contributed exactly `bias` each; remove analytically.
    pad_cnt = float(N * (HWp - HW))
    b_f32 = bias.astype(jnp.float32)
    ssum = ssum - pad_cnt * b_f32
    ssq = ssq - pad_cnt * b_f32 * b_f32
    mean = ssum / M
    # NOTE: E[y^2]-E[y]^2 in f32 can cancel for huge M / large means; the clamp
    # only protects against negative variance, tolerances here are loose.
    var = jnp.maximum(ssq / M - mean * mean, 0.0)   # biased var (torch BN train)
    a = gamma.astype(jnp.float32) * lax.rsqrt(var + eps)
    c = beta.astype(jnp.float32) - mean * a
    a2 = a.reshape(Cout, 1)
    c2 = c.reshape(Cout, 1)

    # ---------------- pass 2: normalize + affine + LeakyReLU -----------------
    # Own (larger) HW tile: pure streaming elementwise pass.
    per_col2 = 2 * Cout * (ybytes + 4)
    if HW <= LANE:
        thw2 = HW
    else:
        max_cols2 = max(thw1, tile_budget // per_col2 // LANE * LANE)
        k = 1
        for cand in range(T1, 0, -1):
            if T1 % cand == 0 and cand * thw1 <= max_cols2:
                k = cand
                break
        thw2 = k * thw1
    T2 = HWp // thw2

    cost2 = pl.CostEstimate(
        flops=int(4 * N * Cout * HWp), transcendentals=0,
        bytes_accessed=int(N * Cout * HWp * (ybytes + 4)))

    z = pl.pallas_call(
        functools.partial(_bn_act_kernel, negative_slope=negative_slope),
        out_shape=jax.ShapeDtypeStruct((N, Cout, HWp), jnp.float32),
        grid=(N, T2),
        in_specs=[pl.BlockSpec((1, Cout, thw2), lambda n, t: (n, 0, t)),
                  pl.BlockSpec((Cout, 1), lambda n, t: (0, 0)),
                  pl.BlockSpec((Cout, 1), lambda n, t: (0, 0))],
        out_specs=pl.BlockSpec((1, Cout, thw2), lambda n, t: (n, 0, t)),
        compiler_params=pltpu.CompilerParams(
            dimension_semantics=("parallel", "parallel"),
            vmem_limit_bytes=vmem_limit),
        cost_estimate=cost2,
    )(y, a2, c2)

    out = z if HWp == HW else z[:, :, :HW]
    # Already channel-major (NCHW); only split the flattened spatial dim.
    return out.reshape(N, Cout, Ho, Wo)


def reference_forward(x, weight, bias, gamma, beta, *, stride, padding,
                      eps=1e-5, negative_slope=0.1):
    """Pure-JAX f32 reference mirroring the PyTorch forward (training-mode BN)."""
    y = lax.conv_general_dilated(
        x, weight, (stride, stride),
        ((padding, padding), (padding, padding)),
        dimension_numbers=('NCHW', 'OIHW', 'NCHW'))
    y = y + bias.reshape(1, -1, 1, 1)
    mean = jnp.mean(y, axis=(0, 2, 3), keepdims=True)
    var = jnp.mean((y - mean) ** 2, axis=(0, 2, 3), keepdims=True)
    y_hat = (y - mean) / jnp.sqrt(var + eps)
    z = gamma.reshape(1, -1, 1, 1) * y_hat + beta.reshape(1, -1, 1, 1)
    return jnp.where(z >= 0, z, negative_slope * z)


if __name__ == "__main__":
    # EncoderBlock(in=4, out=8, k=3, stride=2, pad=1) at small shapes.
    N, Cin, H, W = 2, 4, 16, 16
    Cout, K, stride, padding = 8, 3, 2, 1
    negative_slope = 0.1

    key = jax.random.PRNGKey(0)
    kx, kw, kb = jax.random.split(key, 3)

    x = jax.random.normal(kx, (N, Cin, H, W), dtype=jnp.float32)

    # kaiming_uniform-like conv weight, PyTorch-default uniform conv bias,
    # BatchNorm2d affine defaults.
    fan_in = Cin * K * K
    w_bound = (6.0 / fan_in) ** 0.5
    weight = jax.random.uniform(kw, (Cout, Cin, K, K), jnp.float32,
                                -w_bound, w_bound)
    b_bound = 1.0 / (fan_in ** 0.5)
    bias = jax.random.uniform(kb, (Cout,), jnp.float32, -b_bound, b_bound)
    gamma = jnp.ones((Cout,), dtype=jnp.float32)
    beta = jnp.zeros((Cout,), dtype=jnp.float32)

    out = encoder_block_forward(x, weight, bias, gamma, beta,
                                stride=stride, padding=padding,
                                negative_slope=negative_slope)
    out = jax.block_until_ready(out)

    ref = reference_forward(x, weight, bias, gamma, beta,
                            stride=stride, padding=padding,
                            negative_slope=negative_slope)
    Ho = (H + 2 * padding - K) // stride + 1
    Wo = (W + 2 * padding - K) // stride + 1
    assert out.shape == (N, Cout, Ho, Wo)
    assert jnp.allclose(out, ref, rtol=2e-2, atol=2e-2), "mismatch vs reference"

    print("KERNEL_OK")
</pallas_src>

<mosaic_0001>
module attributes {stable_mosaic.version = 11 : i64} {
  func.func @_conv_stats_kernel(%arg0: i32, %arg1: i32, %arg2: memref<1x36x64xbf16, #tpu.memory_space<vmem>>, %arg3: memref<8x36xbf16, #tpu.memory_space<vmem>>, %arg4: memref<8x1xf32, #tpu.memory_space<vmem>>, %arg5: memref<1x8x64xf32, #tpu.memory_space<vmem>>, %arg6: memref<1x8x1xf32, #tpu.memory_space<vmem>>, %arg7: memref<1x8x1xf32, #tpu.memory_space<vmem>>) attributes {dimension_semantics = [#tpu.dimension_semantics<parallel>, #tpu.dimension_semantics<arbitrary>], iteration_bounds = array<i64: 2, 1>, scalar_prefetch = 0 : i64, scratch_operands = 0 : i64, tpu.core_type = #tpu.core_type<tc>, window_params = [{transform_indices = @transform_0, window_bounds = array<i64: 1, 36, 64>}, {pipeline_mode = #tpu.pipeline_mode<synchronous>, transform_indices = @transform_1, window_bounds = array<i64: 8, 36>}, {pipeline_mode = #tpu.pipeline_mode<synchronous>, transform_indices = @transform_2, window_bounds = array<i64: 8, 1>}, {transform_indices = @transform_3, window_bounds = array<i64: 1, 8, 64>}, {transform_indices = @transform_4, window_bounds = array<i64: 1, 8, 1>}, {transform_indices = @transform_5, window_bounds = array<i64: 1, 8, 1>}]} {
    %c0_i32 = arith.constant 0 : i32
    %0 = arith.cmpi eq, %arg1, %c0_i32 : i32
    %1 = arith.extui %0 : i1 to i32
    %c0_i32_0 = arith.constant 0 : i32
    %2 = arith.cmpi ne, %1, %c0_i32_0 : i32
    scf.if %2 {
      %cst_24 = arith.constant 0.000000e+00 : f32
      %30 = vector.broadcast %cst_24 : f32 to vector<1x8x1xf32>
      %c0_25 = arith.constant 0 : index
      %c0_26 = arith.constant 0 : index
      %c0_27 = arith.constant 0 : index
      %31 = vector.load %arg6[%c0_25, %c0_26, %c0_27] : memref<1x8x1xf32, #tpu.memory_space<vmem>>, vector<1x8x1xf32>
      tpu.vector_store %arg6[%c0_25, %c0_26, %c0_27], %30 {strides = array<i32>} : memref<1x8x1xf32, #tpu.memory_space<vmem>>, vector<1x8x1xf32>,
      %cst_28 = arith.constant 0.000000e+00 : f32
      %32 = vector.broadcast %cst_28 : f32 to vector<1x8x1xf32>
      %c0_29 = arith.constant 0 : index
      %c0_30 = arith.constant 0 : index
      %c0_31 = arith.constant 0 : index
      %33 = vector.load %arg7[%c0_29, %c0_30, %c0_31] : memref<1x8x1xf32, #tpu.memory_space<vmem>>, vector<1x8x1xf32>
      tpu.vector_store %arg7[%c0_29, %c0_30, %c0_31], %32 {strides = array<i32>} : memref<1x8x1xf32, #tpu.memory_space<vmem>>, vector<1x8x1xf32>,
    } else {
    }
    %c0 = arith.constant 0 : index
    %c0_1 = arith.constant 0 : index
    %3 = vector.load %arg3[%c0, %c0_1] : memref<8x36xbf16, #tpu.memory_space<vmem>>, vector<8x36xbf16>
    %c0_2 = arith.constant 0 : index
    %c0_3 = arith.constant 0 : index
    %c0_4 = arith.constant 0 : index
    %4 = vector.load %arg2[%c0_2, %c0_3, %c0_4] : memref<1x36x64xbf16, #tpu.memory_space<vmem>>, vector<1x36x64xbf16>
    %5 = vector.shape_cast %4 : vector<1x36x64xbf16> to vector<36x64xbf16>
    %cst = arith.constant dense<0.000000e+00> : vector<8x64xf32>
    %6 = tpu.matmul %3, %5, %cst {dimension_numbers = #tpu.dot_dimension_numbers<[1], [0], [0], [1], [0, 0, 1, 1], [], []>} : vector<8x36xbf16>, vector<36x64xbf16>, vector<8x64xf32> -> vector<8x64xf32>
    %c0_5 = arith.constant 0 : index
    %c0_6 = arith.constant 0 : index
    %7 = vector.load %arg4[%c0_5, %c0_6] : memref<8x1xf32, #tpu.memory_space<vmem>>, vector<8x1xf32>
    %8 = vector.broadcast %7 : vector<8x1xf32> to vector<8x64xf32>
    %9 = arith.addf %6, %8 : vector<8x64xf32>
    %c0_7 = arith.constant 0 : index
    %c0_8 = arith.constant 0 : index
    %c0_9 = arith.constant 0 : index
    %10 = vector.load %arg5[%c0_7, %c0_8, %c0_9] : memref<1x8x64xf32, #tpu.memory_space<vmem>>, vector<1x8x64xf32>
    %11 = vector.shape_cast %10 : vector<1x8x64xf32> to vector<8x64xf32>
    %12 = vector.shape_cast %9 : vector<8x64xf32> to vector<1x8x64xf32>
    tpu.vector_store %arg5[%c0_7, %c0_8, %c0_9], %12 {strides = array<i32>} : memref<1x8x64xf32, #tpu.memory_space<vmem>>, vector<1x8x64xf32>,
    %c0_10 = arith.constant 0 : index
    %c0_11 = arith.constant 0 : index
    %c0_12 = arith.constant 0 : index
    %13 = vector.load %arg6[%c0_10, %c0_11, %c0_12] : memref<1x8x1xf32, #tpu.memory_space<vmem>>, vector<1x8x1xf32>
    %14 = vector.shape_cast %13 : vector<1x8x1xf32> to vector<8x1xf32>
    %cst_13 = arith.constant dense<0.000000e+00> : vector<8xf32>
    %15 = vector.multi_reduction <add>, %9, %cst_13 [1] : vector<8x64xf32> to vector<8xf32>
    %16 = vector.shape_cast %15 : vector<8xf32> to vector<8x1xf32>
    %17 = arith.addf %14, %16 : vector<8x1xf32>
    %c0_14 = arith.constant 0 : index
    %c0_15 = arith.constant 0 : index
    %c0_16 = arith.constant 0 : index
    %18 = vector.load %arg6[%c0_14, %c0_15, %c0_16] : memref<1x8x1xf32, #tpu.memory_space<vmem>>, vector<1x8x1xf32>
    %19 = vector.shape_cast %18 : vector<1x8x1xf32> to vector<8x1xf32>
    %20 = vector.shape_cast %17 : vector<8x1xf32> to vector<1x8x1xf32>
    tpu.vector_store %arg6[%c0_14, %c0_15, %c0_16], %20 {strides = array<i32>} : memref<1x8x1xf32, #tpu.memory_space<vmem>>, vector<1x8x1xf32>,
    %c0_17 = arith.constant 0 : index
    %c0_18 = arith.constant 0 : index
    %c0_19 = arith.constant 0 : index
    %21 = vector.load %arg7[%c0_17, %c0_18, %c0_19] : memref<1x8x1xf32, #tpu.memory_space<vmem>>, vector<1x8x1xf32>
    %22 = vector.shape_cast %21 : vector<1x8x1xf32> to vector<8x1xf32>
    %23 = arith.mulf %9, %9 : vector<8x64xf32>
    %cst_20 = arith.constant dense<0.000000e+00> : vector<8xf32>
    %24 = vector.multi_reduction <add>, %23, %cst_20 [1] : vector<8x64xf32> to vector<8xf32>
    %25 = vector.shape_cast %24 : vector<8xf32> to vector<8x1xf32>
    %26 = arith.addf %22, %25 : vector<8x1xf32>
    %c0_21 = arith.constant 0 : index
    %c0_22 = arith.constant 0 : index
    %c0_23 = arith.constant 0 : index
    %27 = vector.load %arg7[%c0_21, %c0_22, %c0_23] : memref<1x8x1xf32, #tpu.memory_space<vmem>>, vector<1x8x1xf32>
    %28 = vector.shape_cast %27 : vector<1x8x1xf32> to vector<8x1xf32>
    %29 = vector.shape_cast %26 : vector<8x1xf32> to vector<1x8x1xf32>
    tpu.vector_store %arg7[%c0_21, %c0_22, %c0_23], %29 {strides = array<i32>} : memref<1x8x1xf32, #tpu.memory_space<vmem>>, vector<1x8x1xf32>,
    return
  }
  func.func @transform_0(%arg0: i32, %arg1: i32) -> (i32, i32, i32) {
    %c0_i32 = arith.constant 0 : i32
    %c0_i32_0 = arith.constant 0 : i32
    return %arg0, %c0_i32, %arg1 : i32, i32, i32
  }
  func.func @transform_1(%arg0: i32, %arg1: i32) -> (i32, i32) {
    %c0_i32 = arith.constant 0 : i32
    %c0_i32_0 = arith.constant 0 : i32
    %c0_i32_1 = arith.constant 0 : i32
    return %c0_i32, %c0_i32_0 : i32, i32
  }
  func.func @transform_2(%arg0: i32, %arg1: i32) -> (i32, i32) {
    %c0_i32 = arith.constant 0 : i32
    %c0_i32_0 = arith.constant 0 : i32
    %c0_i32_1 = arith.constant 0 : i32
    return %c0_i32, %c0_i32_0 : i32, i32
  }
  func.func @transform_3(%arg0: i32, %arg1: i32) -> (i32, i32, i32) {
    %c0_i32 = arith.constant 0 : i32
    %c0_i32_0 = arith.constant 0 : i32
    return %arg0, %c0_i32, %arg1 : i32, i32, i32
  }
  func.func @transform_4(%arg0: i32, %arg1: i32) -> (i32, i32, i32) {
    %c0_i32 = arith.constant 0 : i32
    %c0_i32_0 = arith.constant 0 : i32
    %c0_i32_1 = arith.constant 0 : i32
    return %arg0, %c0_i32, %c0_i32_0 : i32, i32, i32
  }
  func.func @transform_5(%arg0: i32, %arg1: i32) -> (i32, i32, i32) {
    %c0_i32 = arith.constant 0 : i32
    %c0_i32_0 = arith.constant 0 : i32
    %c0_i32_1 = arith.constant 0 : i32
    return %arg0, %c0_i32, %c0_i32_0 : i32, i32, i32
  }
}

</mosaic_0001>

<llo_original>
// kernel: tpu_custom_call.1
$region0: #{tpu_custom_call.1}
  #allocation0 [shape = 'u32[]', space=smem, size = 0x4, offset = 0x4, fixed_abs, tag = 'smem constant byte address 0x4 - core index']
  #allocation1 [shape = 'u32[144,128]{1,0:T(1,128)}', space=vmem, size = 0x12000, scoped, tag = 'internal scratch']
  %s0 = inlined_call_operand.vmem [shape: bf16[2,36,64], index: 0, kind: input, shape index: {}]
  %s1 = inlined_call_operand.vmem [shape: bf16[8,36], index: 1, kind: input, shape index: {}]
  %s2 = inlined_call_operand.vmem [shape: f32[8,1], index: 2, kind: input, shape index: {}]
  %s3 = inlined_call_operand.hbm [shape: f32[2,8,64], index: 3, kind: output, shape index: {0}]
  %s4 = inlined_call_operand.vmem [shape: f32[2,8,1], index: 4, kind: output, shape index: {1}]
  %s5 = inlined_call_operand.vmem [shape: f32[2,8,1], index: 5, kind: output, shape index: {2}]
  %6 = xla_tuple %s3, %s4, %s5
  %s7 = sld [smem:[#allocation0]]
  $region65: #{tpu_custom_call.1} parent=0
    _
  %s9 = ssub.s32 1, %s7
  %s10 = scalar_select 0, %s9, %s7
  $region1: #{tpu_custom_call.1} parent=0
    #allocation2 [shape = 'u8[8192]{0}', space=vmem, size = 0x2000, scoped, tag = 'output window, operand 0']
    #allocation3 [shape = 's32[2]{0}', space=sflag, size = 0x8, scoped, tag = 'scoped memory for tpu_custom_call.1']
    %11 = vsyncpa [#allocation3], 0
    %s12 = scalar_lea.sflag [#allocation3], 1
    %13 = vsyncpa %s12, 0
    loop: start=0, step=1, limit=4
    $region2: #{tpu_custom_call.1} parent=1 // loop_pre_header
      _
    $region3: #{tpu_custom_call.1} parent=1 // loop_header
      %s15 = sphi 0, %s19
      %p16 = scmp.ge.s32.totalorder %s15, 4
      %s22 = sphi 0, %s34
      %s23 = sphi 0, %s30
      %s24 = sphi 0, %s22
      %s25 = sphi 0, %s23
      %s26 = sphi 0, %s24
      %s27 = sphi 0, %s25
      %s39 = sphi 0, %s41
      %s42 = sphi 0, %s39
      %s43 = sphi 0, %s42
      %s59 = sphi 0, %s43
      %s63 = sphi 0, %s63
      %s65 = sphi 0, %s63
      %s66 = sphi 0, %s65
      %s80 = sphi 0, %s66
      %s84 = sphi 0, %s84
      %s86 = sphi 0, %s84
      %s87 = sphi 0, %s86
      %s101 = sphi 0, %s87
      %s109 = sphi 0, %s111
      %s112 = sphi 0, %s109
      %s113 = sphi 0, %s112
      %s129 = sphi 0, %s113
      %s135 = sphi 0, %s137
      %s138 = sphi 0, %s135
      %s139 = sphi 0, %s138
      %s155 = sphi 0, %s139
      %s161 = sphi 0, %s163
      %s164 = sphi 0, %s161
      %s165 = sphi 0, %s164
      %s181 = sphi 0, %s165
    $region4: #{tpu_custom_call.1} parent=1 // loop_header_branch
      %18 = sbr.rel (%p16) target = $region8
    $region5: #{tpu_custom_call.1} parent=1 // loop_body
      %s20 = ssub.s32 %s15, 1
      %s21 = ssub.s32 %s15, 2
      %s28 = sadd.s32 1, %s23
      %p29 = scmp.ge.s32.totalorder %s28, 1
      %s30 = scalar_select %p29, 0, %s28
      %s31 = sadd.s32 1, %s22
      %s32 = scalar_select %p29, %s31, %s22
      %p33 = scmp.ge.s32.totalorder %s32, 2
      %s34 = scalar_select %p33, 0, %s32
      %s35 = ssub.s32 %s22, %s34
      %s36 = ssub.s32 %s23, %s30
      %s37 = sor.u32 %s35, %s36
      %p38 = scmp.eq.s32.totalorder %s37, 0
      %s40 = sadd.s32 %s39, 1
      %s41 = scalar_select %p38, %s39, %s40
      %p44 = pneg %p38
      %p45 = scmp.eq.s32.totalorder %s15, 1
      %p46 = por %p44, %p45
      %p47 = scmp.ne.s32.totalorder %s39, %s42
      %p48 = scmp.eq.s32.totalorder %s15, 0
      %p49 = por %p47, %p48
      %p50 = scmp.ne.s32.totalorder %s39, %s42
      %p51 = scmp.eq.s32.totalorder %s20, 1
      %p52 = por %p50, %p51
      %p53 = scmp.ne.s32.totalorder %s42, %s43
      %p54 = scmp.eq.s32.totalorder %s20, 0
      %p55 = por %p53, %p54
      %p56 = scmp.ne.s32.totalorder %s42, %s43
      %p57 = scmp.eq.s32.totalorder %s21, 1
      %p58 = por %p56, %p57
      %p60 = scmp.ne.s32.totalorder %s43, %s59
      %p61 = scmp.eq.s32.totalorder %s21, 0
      %p62 = por %p60, %p61
      %s64 = sadd.s32 %s63, 1
      %p67 = scmp.eq.s32.totalorder %s15, 1
      %p68 = scmp.ne.s32.totalorder %s63, %s65
      %p69 = scmp.eq.s32.totalorder %s15, 0
      %p70 = por %p68, %p69
      %p71 = scmp.ne.s32.totalorder %s63, %s65
      %p72 = scmp.eq.s32.totalorder %s20, 1
      %p73 = por %p71, %p72
      %p74 = scmp.ne.s32.totalorder %s65, %s66
      %p75 = scmp.eq.s32.totalorder %s20, 0
      %p76 = por %p74, %p75
      %p77 = scmp.ne.s32.totalorder %s65, %s66
      %p78 = scmp.eq.s32.totalorder %s21, 1
      %p79 = por %p77, %p78
      %p81 = scmp.ne.s32.totalorder %s66, %s80
      %p82 = scmp.eq.s32.totalorder %s21, 0
      %p83 = por %p81, %p82
      %s85 = sadd.s32 %s84, 1
      %p88 = scmp.eq.s32.totalorder %s15, 1
      %p89 = scmp.ne.s32.totalorder %s84, %s86
      %p90 = scmp.eq.s32.totalorder %s15, 0
      %p91 = por %p89, %p90
      %p92 = scmp.ne.s32.totalorder %s84, %s86
      %p93 = scmp.eq.s32.totalorder %s20, 1
      %p94 = por %p92, %p93
      %p95 = scmp.ne.s32.totalorder %s86, %s87
      %p96 = scmp.eq.s32.totalorder %s20, 0
      %p97 = por %p95, %p96
      %p98 = scmp.ne.s32.totalorder %s86, %s87
      %p99 = scmp.eq.s32.totalorder %s21, 1
      %p100 = por %p98, %p99
      %p102 = scmp.ne.s32.totalorder %s87, %s101
      %p103 = scmp.eq.s32.totalorder %s21, 0
      %p104 = por %p102, %p103
      %s105 = ssub.s32 %s22, %s34
      %s106 = ssub.s32 %s23, %s30
      %s107 = sor.u32 %s105, %s106
      %p108 = scmp.eq.s32.totalorder %s107, 0
      %s110 = sadd.s32 %s109, 1
      %s111 = scalar_select %p108, %s109, %s110
      %p114 = pneg %p108
      %p115 = scmp.eq.s32.totalorder %s15, 1
      %p116 = por %p114, %p115
      %p117 = scmp.ne.s32.totalorder %s109, %s112
      %p118 = scmp.eq.s32.totalorder %s15, 0
      %p119 = por %p117, %p118
      %p120 = scmp.ne.s32.totalorder %s109, %s112
      %p121 = scmp.eq.s32.totalorder %s20, 1
      %p122 = por %p120, %p121
      %p123 = scmp.ne.s32.totalorder %s112, %s113
      %p124 = scmp.eq.s32.totalorder %s20, 0
      %p125 = por %p123, %p124
      %p126 = scmp.ne.s32.totalorder %s112, %s113
      %p127 = scmp.eq.s32.totalorder %s21, 1
      %p128 = por %p126, %p127
      %p130 = scmp.ne.s32.totalorder %s113, %s129
      %p131 = scmp.eq.s32.totalorder %s21, 0
      %p132 = por %p130, %p131
      %s133 = ssub.s32 %s22, %s34
      %p134 = scmp.eq.s32.totalorder %s133, 0
      %s136 = sadd.s32 %s135, 1
      %s137 = scalar_select %p134, %s135, %s136
      %p140 = pneg %p134
      %p141 = scmp.eq.s32.totalorder %s15, 1
      %p142 = por %p140, %p141
      %p143 = scmp.ne.s32.totalorder %s135, %s138
      %p144 = scmp.eq.s32.totalorder %s15, 0
      %p145 = por %p143, %p144
      %p146 = scmp.ne.s32.totalorder %s135, %s138
      %p147 = scmp.eq.s32.totalorder %s20, 1
      %p148 = por %p146, %p147
      %p149 = scmp.ne.s32.totalorder %s138, %s139
      %p150 = scmp.eq.s32.totalorder %s20, 0
      %p151 = por %p149, %p150
      %p152 = scmp.ne.s32.totalorder %s138, %s139
      %p153 = scmp.eq.s32.totalorder %s21, 1
      %p154 = por %p152, %p153
      %p156 = scmp.ne.s32.totalorder %s139, %s155
      %p157 = scmp.eq.s32.totalorder %s21, 0
      %p158 = por %p156, %p157
      %s159 = ssub.s32 %s22, %s34
      %p160 = scmp.eq.s32.totalorder %s159, 0
      %s162 = sadd.s32 %s161, 1
      %s163 = scalar_select %p160, %s161, %s162
      %p166 = pneg %p160
      %p167 = scmp.eq.s32.totalorder %s15, 1
      %p168 = por %p166, %p167
      %p169 = scmp.ne.s32.totalorder %s161, %s164
      %p170 = scmp.eq.s32.totalorder %s15, 0
      %p171 = por %p169, %p170
      %p172 = scmp.ne.s32.totalorder %s161, %s164
      %p173 = scmp.eq.s32.totalorder %s20, 1
      %p174 = por %p172, %p173
      %p175 = scmp.ne.s32.totalorder %s164, %s165
      %p176 = scmp.eq.s32.totalorder %s20, 0
      %p177 = por %p175, %p176
      %p178 = scmp.ne.s32.totalorder %s164, %s165
      %p179 = scmp.eq.s32.totalorder %s21, 1
      %p180 = por %p178, %p179
      %p182 = scmp.ne.s32.totalorder %s165, %s181
      %p183 = scmp.eq.s32.totalorder %s21, 0
      %p184 = por %p182, %p183
      %p185 = scmp.le.s32.totalorder 1, %s15
      %p186 = scmp.lt.s32.totalorder %s15, 3
      %p187 = pnand %p185, %p186
      %p188 = pneg %p187
      // Predicated region
      $region9: #{tpu_custom_call.1} parent=5 // pred_check
        _
      $region10: #{tpu_custom_call.1} parent=5 // pred_check_branch
        %190 = sbr.rel (%p187) target = $region12
      $region11: #{tpu_custom_call.1} parent=5 // pred_region
        %s191 = ssub.s32 %s15, 1
        // Predicated region
        $region13: #{tpu_custom_call.1} parent=11 // pred_check
          %p192 = pneg %p76
        $region14: #{tpu_custom_call.1} parent=11 // pred_check_branch
          %194 = sbr.rel (%p192) target = $region16
        $region15: #{tpu_custom_call.1} parent=11 // pred_region
          _
        $region16: #{tpu_custom_call.1} parent=11 // pred_fallthru
          _
        // Predicated region
        $region17: #{tpu_custom_call.1} parent=11 // pred_check
          %p195 = pneg %p97
        $region18: #{tpu_custom_call.1} parent=11 // pred_check_branch
          %197 = sbr.rel (%p195) target = $region20
        $region19: #{tpu_custom_call.1} parent=11 // pred_region
          _
        $region20: #{tpu_custom_call.1} parent=11 // pred_fallthru
          _
      $region12: #{tpu_custom_call.1} parent=5 // pred_fallthru
        _
      %p198 = scmp.lt.s32.totalorder %s15, 2
      // Predicated region
      $region21: #{tpu_custom_call.1} parent=5 // pred_check
        %p199 = pneg %p198
      $region22: #{tpu_custom_call.1} parent=5 // pred_check_branch
        %201 = sbr.rel (%p199) target = $region24
      $region23: #{tpu_custom_call.1} parent=5 // pred_region
        // Predicated region
        $region25: #{tpu_custom_call.1} parent=23 // pred_check
          %p202 = pneg %p49
        $region26: #{tpu_custom_call.1} parent=23 // pred_check_branch
          %204 = sbr.rel (%p202) target = $region28
        $region27: #{tpu_custom_call.1} parent=23 // pred_region
          %p205 = scmp.lt.s32.totalorder %s22, 1
          %s206 = scalar_select %p205, %s22, 1
          %p207 = scmp.lt.s32.totalorder %s23, 0
          %s208 = scalar_select %p207, %s23, 0
          %s209 = smul.addr %s206, 5
          %s210 = sadd.s32 %s208, %s209
          %s211 = smul.addr %s210, 4
          %s212 = scalar_lea.vmem %s0, %s211
        $region28: #{tpu_custom_call.1} parent=23 // pred_fallthru
          _
      $region24: #{tpu_custom_call.1} parent=5 // pred_fallthru
        _
      %p213 = scmp.le.s32.totalorder 1, %s15
      %p214 = scmp.lt.s32.totalorder %s15, 3
      %p215 = pnand %p213, %p214
      %p216 = pneg %p215
      // Predicated region
      $region29: #{tpu_custom_call.1} parent=5 // pred_check
        _
      $region30: #{tpu_custom_call.1} parent=5 // pred_check_branch
        %218 = sbr.rel (%p215) target = $region32
      $region31: #{tpu_custom_call.1} parent=5 // pred_region
        %s219 = ssub.s32 %s15, 1
        %p220 = scmp.lt.s32.totalorder %s24, 1
        %s221 = scalar_select %p220, %s24, 1
        %p222 = scmp.lt.s32.totalorder %s25, 0
        %s223 = scalar_select %p222, %s25, 0
        %s224 = smul.addr %s221, 5
        %s225 = sadd.s32 %s223, %s224
        %s226 = smul.addr %s225, 4
        %s227 = scalar_lea.vmem %s0, %s226
        %p228 = pneg %p55
        %p229 = pneg %p52
        %p230 = pneg %p76
        %p231 = pneg %p73
        %p232 = pneg %p97
        %p233 = pneg %p94
        %p234 = pneg %p125
        %p235 = pneg %p122
        %s236 = sand.u32 %s112, 1
        %s237 = scalar_lea.sflag [#allocation3], %s236
        %s238 = sand.u32 %s112, 1
        %s239 = smul.addr %s238, 8
        %s240 = scalar_lea.vmem [#allocation2], %s239
        %p241 = pneg %p151
        %p242 = pneg %p148
        %p243 = scmp.lt.s32.totalorder %s24, 1
        %s244 = scalar_select %p243, %s24, 1
        %s245 = smul.addr %s244, 8
        %s246 = scalar_lea.vmem %s4, %s245
        %p247 = pneg %p177
        %p248 = pneg %p174
        %p249 = scmp.lt.s32.totalorder %s24, 1
        %s250 = scalar_select %p249, %s24, 1
        %s251 = smul.addr %s250, 8
        %s252 = scalar_lea.vmem %s5, %s251
        %p253 = scmp.lt.s32.totalorder %s24, 1
        %s254 = scalar_select %p253, %s24, 1
        %p255 = scmp.lt.s32.totalorder %s25, 0
        %s256 = scalar_select %p255, %s25, 0
        %s257 = smul.addr %s254, 5
        %s258 = sadd.s32 %s256, %s257
        %s259 = smul.addr %s258, 4
        %s260 = scalar_lea.vmem %s0, %s259
        %p261 = scmp.lt.s32.totalorder %s24, 1
        %s262 = scalar_select %p261, %s24, 1
        %s263 = smul.addr %s262, 8
        %s264 = scalar_lea.vmem %s4, %s263
        %p265 = scmp.lt.s32.totalorder %s24, 1
        %s266 = scalar_select %p265, %s24, 1
        %s267 = smul.addr %s266, 8
        %s268 = scalar_lea.vmem %s5, %s267
        %p270 = scmp.eq.s32.totalorder %s25, 0
        // Predicated region
        $region33: #{tpu_custom_call.1} parent=31 // pred_check
          %p271 = pneg %p270
        $region34: #{tpu_custom_call.1} parent=31 // pred_check_branch
          %273 = sbr.rel (%p271) target = $region36
        $region35: #{tpu_custom_call.1} parent=31 // pred_region
          %vm274 = vcmask 7168
          %275 = vst.msk [vmem:[%s264] sm:$0xff] %vm274, 0.0
          %276 = vst.msk [vmem:[%s268] sm:$0xff] %vm274, 0.0
        $region36: #{tpu_custom_call.1} parent=31 // pred_fallthru
          _
        %v277 = vld [vmem:[%s1] sm:$0xf]
        %v278 = vld [vmem:[%s260] sm:$0xf]
        %v279 = vld [vmem:[%s260 + $0x4] sm:$0xf]
        %v280 = vld [vmem:[%s260 + $0x8] sm:$0xf]
        %v281 = vld [vmem:[%s260 + $0xc] sm:$0xf]
        %v282 = vld [vmem:[%s260 + $0x10] sm:$0x3]
        %v283 = vld [vmem:[%s2] sm:$0xff]
        %285 = vset.pattern.permute.xlu0 0
        %286 = vperm.xlu0 %285, %v283
        %v287 = vpop.permute.xlu0 %286
        %v294 = vunpack.c.l.b16 %v278
        %v295 = vunpack.c.l.b16 %v279
        %v296 = vunpack.c.l.b16 %v280
        %v297 = vunpack.c.l.b16 %v281
        %v298 = vunpack.c.l.b16 %v282
        %v299 = vpack.c.b16 %v295, %v294
        %v300 = vpack.c.b16 %v297, %v296
        %v301 = vpack.c.b16 %v298, %v298
        %vm304 = vcmask 293888
        %v306 = vsel %vm304, %v277, 0
        %vm308 = vcmask 1041408
        %v310 = vsel %vm308, %v301, 0
        %312 = vmatprep.subr.bf16.mxu0 0
        %313 = vmatpush1.bf16.msra.mxu0 0
        %314 = vmatprep.subr.bf16.mxu0 0
        %315 = vmatpush1.bf16.msra.mxu0 0
        %316 = vmatprep.subr.bf16.mxu0 0
        %317 = vmatpush1.bf16.msra.mxu0 0
        %318 = vmatprep.subr.bf16.mxu0 0
        %319 = vmatpush1.bf16.msra.mxu0 0
        %320 = vmatprep.subr.bf16.mxu0 0
        %321 = vmatpush1.bf16.msra.mxu0 0
        %322 = vmatprep.subr.bf16.mxu0 0
        %323 = vmatpush1.bf16.msra.mxu0 %v310
        %324 = vmatprep.subr.bf16.mxu0 0
        %325 = vmatpush1.bf16.msra.mxu0 %v300
        %326 = vmatprep.subr.bf16.mxu0 0
        %327 = vmatpush1.bf16.msra.mxu0 %v299
        %328 = vmatprep.subr.bf16.mxu0 0
        %329 = vmatpush2.bf16.msra.mxu0 0
        %330 = vmatprep.subr.bf16.mxu0 0
        %331 = vmatpush2.bf16.msra.mxu0 0
        %332 = vmatprep.subr.bf16.mxu0 0
        %333 = vmatpush2.bf16.msra.mxu0 0
        %334 = vmatprep.subr.bf16.mxu0 0
        %335 = vmatpush2.bf16.msra.mxu0 0
        %336 = vmatprep.subr.bf16.mxu0 0
        %337 = vmatpush2.bf16.msra.mxu0 0
        %338 = vmatprep.subr.bf16.mxu0 0
        %339 = vmatpush2.bf16.msra.mxu0 0
        %340 = vmatprep.subr.bf16.mxu0 0
        %341 = vmatpush2.bf16.msra.mxu0 0
        %342 = vmatprep.subr.bf16.mxu0 0
        %343 = vmatpush2.bf16.msra.mxu0 0
        %344 = vmatprep.mubr.bf16.mxu0 0
        %345 = vmatmul.mubr.bf16.gmra.mxu0 %v306
        %v346 = vpop.f32.mrf.mxu0
        %v347 = vadd.f32 %v287, %v346
        %v348 = vpop.f32.mrf.mxu0
        %v349 = vpop.f32.mrf.mxu0
        %v350 = vpop.f32.mrf.mxu0
        %351 = vdwg.mxu0
        %vm352 = vcmask 523264
        %353 = vst.msk [vmem:[%s240] sm:$0xff] %vm352, %v347
        %v354 = vld [vmem:[%s264] sm:$0xff]
        %v355 = vsel %vm352, %v347, 0.0
        %356 = vadd.xlane.f32.xlu0 %v355
        %v357 = vpop.xlane.xlu0 %356
        %v358 = vadd.f32 %v354, %v357
        %vm359 = vcmask 7168
        %360 = vst.msk [vmem:[%s264] sm:$0xff] %vm359, %v358
        %v361 = vld [vmem:[%s268] sm:$0xff]
        %v362 = vmul.f32 %v347, %v347
        %v363 = vsel %vm352, %v362, 0.0
        %364 = vadd.xlane.f32.xlu0 %v363
        %v365 = vpop.xlane.xlu0 %364
        %v366 = vadd.f32 %v361, %v365
        %367 = vst.msk [vmem:[%s268] sm:$0xff] %vm359, %v366
        %s368 = sand.u32 %s112, 1
        %s369 = scalar_lea.sflag [#allocation3], %s368
        %s370 = sand.u32 %s112, 1
        %s371 = smul.addr %s370, 8
        %s372 = scalar_lea.vmem [#allocation2], %s371
        %p373 = scmp.lt.s32.totalorder %s24, 1
        %s374 = scalar_select %p373, %s24, 1
        %s375 = smul.addr %s374, 8
        %s376 = scalar_lea.vmem %s4, %s375
        %p377 = scmp.lt.s32.totalorder %s24, 1
        %s378 = scalar_select %p377, %s24, 1
        %s379 = smul.addr %s378, 8
        %s380 = scalar_lea.vmem %s5, %s379
        // Predicated region
        $region37: #{tpu_custom_call.1} parent=31 // pred_check
          %p381 = pneg %p122
        $region38: #{tpu_custom_call.1} parent=31 // pred_check_branch
          %383 = sbr.rel (%p381) target = $region40
        $region39: #{tpu_custom_call.1} parent=31 // pred_region
          %s385 = ssub.s32 128, 128
          %386 = vsyncadd %s369, %s385
          %s387 = sadd.s32 %s25, %s24
          %s388 = smul.addr %s387, 128
          %s389 = scalar_lea.hbm %s3, %s388
          %s391 = sshll.u32 %s372, 4
          %s392 = int_to_ptr.vmem [resolvable:$true] %s391
          %394 = dma.vmem_to_hbm [thread:$0]  %s392, 128, %s389, %s369
        $region40: #{tpu_custom_call.1} parent=31 // pred_fallthru
          _
        // Predicated region
        $region41: #{tpu_custom_call.1} parent=31 // pred_check
          %p395 = pneg %p148
        $region42: #{tpu_custom_call.1} parent=31 // pred_check_branch
          %397 = sbr.rel (%p395) target = $region44
        $region43: #{tpu_custom_call.1} parent=31 // pred_region
          _
        $region44: #{tpu_custom_call.1} parent=31 // pred_fallthru
          _
        // Predicated region
        $region45: #{tpu_custom_call.1} parent=31 // pred_check
          %p398 = pneg %p174
        $region46: #{tpu_custom_call.1} parent=31 // pred_check_branch
          %400 = sbr.rel (%p398) target = $region48
        $region47: #{tpu_custom_call.1} parent=31 // pred_region
          _
        $region48: #{tpu_custom_call.1} parent=31 // pred_fallthru
          _
      $region32: #{tpu_custom_call.1} parent=5 // pred_fallthru
        _
      %p401 = scmp.le.s32.totalorder 2, %s15
      // Predicated region
      $region49: #{tpu_custom_call.1} parent=5 // pred_check
        %p402 = pneg %p401
      $region50: #{tpu_custom_call.1} parent=5 // pred_check_branch
        %404 = sbr.rel (%p402) target = $region52
      $region51: #{tpu_custom_call.1} parent=5 // pred_region
        %s405 = ssub.s32 %s15, 2
        // Predicated region
        $region53: #{tpu_custom_call.1} parent=51 // pred_check
          %p406 = pneg %p128
        $region54: #{tpu_custom_call.1} parent=51 // pred_check_branch
          %408 = sbr.rel (%p406) target = $region56
        $region55: #{tpu_custom_call.1} parent=51 // pred_region
          %s409 = sand.u32 %s113, 1
          %s410 = scalar_lea.sflag [#allocation3], %s409
          %s411 = sand.u32 %s113, 1
          %s412 = smul.addr %s411, 8
          %s413 = scalar_lea.vmem [#allocation2], %s412
          %414 = dma.done %s410, 128
        $region56: #{tpu_custom_call.1} parent=51 // pred_fallthru
          _
        // Predicated region
        $region57: #{tpu_custom_call.1} parent=51 // pred_check
          %p415 = pneg %p154
        $region58: #{tpu_custom_call.1} parent=51 // pred_check_branch
          %417 = sbr.rel (%p415) target = $region60
        $region59: #{tpu_custom_call.1} parent=51 // pred_region
          %p418 = scmp.lt.s32.totalorder %s26, 1
          %s419 = scalar_select %p418, %s26, 1
          %s420 = smul.addr %s419, 8
          %s421 = scalar_lea.vmem %s4, %s420
        $region60: #{tpu_custom_call.1} parent=51 // pred_fallthru
          _
        // Predicated region
        $region61: #{tpu_custom_call.1} parent=51 // pred_check
          %p422 = pneg %p180
        $region62: #{tpu_custom_call.1} parent=51 // pred_check_branch
          %424 = sbr.rel (%p422) target = $region64
        $region63: #{tpu_custom_call.1} parent=51 // pred_region
          %p425 = scmp.lt.s32.totalorder %s26, 1
          %s426 = scalar_select %p425, %s26, 1
          %s427 = smul.addr %s426, 8
          %s428 = scalar_lea.vmem %s5, %s427
        $region64: #{tpu_custom_call.1} parent=51 // pred_fallthru
          _
      $region52: #{tpu_custom_call.1} parent=5 // pred_fallthru
        _
    $region6: #{tpu_custom_call.1} parent=1 // loop_footer
      %s19 = sadd.s32 1, %s15
    $region7: #{tpu_custom_call.1} parent=1 // loop_footer_branch
      %14 = sbr.rel target = $region3
    $region8: #{tpu_custom_call.1} parent=1 // loop_exit
      _
    %429 = vsyncpa [#allocation3], 1
    %s430 = scalar_lea.sflag [#allocation3], 1
    %431 = vsyncpa %s430, 1

</llo_original>
